<compile_context>
chip_gen: v5e
topology: v5e:2x2
jax: 0.10.0
libtpu: 0.0.40
codegen_flags: <defaults>
</compile_context>

<pallas_src>
import functools
import math

import jax
import jax.numpy as jnp
from jax.experimental import pallas as pl
from jax.experimental.pallas import tpu as pltpu


MIN_VAL = -1.0
MAX_VAL = 1.0
SELF_ASSOC_WEIGHT = 1.0

_MIB = 1024 * 1024


# ---------------------------------------------------------------------------
# Kernel
# ---------------------------------------------------------------------------
def _icfa_kernel(x_ref, w_ref, o_ref, *scratch,
                 tm, tk, min_val, max_val, self_w,
                 constrain_in_kernel, use_acc_scratch, single_k):
    # x_ref: (1, Bp, tk)   attr-major activations (K tile on lanes)
    # w_ref: (1, tm, tk)   raw association-matrix tile W[a, i*tm:, k*tk:]
    # o_ref: (1, Bp, tm)   lane-dense output tile
    # scratch: optional (Bp, tm) f32 accumulator (only for non-f32 outputs)
    i = pl.program_id(1)        # output-row tile index of W
    k = pl.program_id(2)        # contraction (map_units) tile index

    w = w_ref[0]                                        # (tm, tk)
    if constrain_in_kernel:
        # AssociationMatrix.constrain_(): clamp + set GLOBAL diagonal to
        # self_assoc_weight, fused per tile (trivial VPU work hidden under W DMA).
        w = jnp.clip(w, jnp.asarray(min_val, w.dtype), jnp.asarray(max_val, w.dtype))
        r_minus_c = (jax.lax.broadcasted_iota(jnp.int32, (tm, tk), 0)
                     - jax.lax.broadcasted_iota(jnp.int32, (tm, tk), 1))
        diag = r_minus_c == (k * tk - i * tm)           # i*tm + r == k*tk + c
        w = jnp.where(diag, jnp.asarray(self_w, w.dtype), w)

    x = x_ref[0]                                        # (Bp, tk)
    if x.dtype != w.dtype:
        x = x.astype(w.dtype)   # tiny cast; lets callers stream bf16 weights

    # (Bp, tk) . (tm, tk)^T -> (Bp, tm): map_units lane-dense on the output,
    # f32 accumulation on the MXU.
    contrib = jax.lax.dot_general(
        x, w, dimension_numbers=(((1,), (1,)), ((), ())),
        preferred_element_type=jnp.float32)

    if single_k:
        o_ref[0] = contrib.astype(o_ref.dtype)
    elif not use_acc_scratch:
        # f32 output: accumulate directly into the (k-resident) output block.
        @pl.when(k == 0)
        def _init():
            o_ref[...] = jnp.zeros_like(o_ref)
        o_ref[0] += contrib
    else:
        acc_ref = scratch[0]

        @pl.when(k == 0)
        def _init():
            acc_ref[...] = jnp.zeros_like(acc_ref)
        acc_ref[...] += contrib

        @pl.when(k == pl.num_programs(2) - 1)
        def _fin():
            o_ref[0] = acc_ref[...].astype(o_ref.dtype)


# ---------------------------------------------------------------------------
# Tile / VMEM selection (per TPU generation)
# ---------------------------------------------------------------------------
def _vmem_budget_and_tile_target():
    kind = ""
    try:
        kind = jax.devices()[0].device_kind.lower()
    except Exception:
        pass
    if "v7" in kind or "tpu7" in kind or "7x" in kind:
        # v7x: 64 MiB physical VMEM, 3.2 TB/s HBM -> biggest tiles, least headroom.
        return 48 * _MIB, 12 * _MIB
    if "v6" in kind:
        return 64 * _MIB, 8 * _MIB
    # v5e / unknown
    return 48 * _MIB, 4 * _MIB


def _aligned_divisors(m, align):
    return [d for d in range(align, m + 1, align) if m % d == 0]


def _auto_tiles(m, a, w_itemsize, w_tile_target_bytes):
    """Pick (tm, tk): divisors of m, multiples of 128 (256 when possible), sized so
    the W tile approaches the per-generation byte target."""
    align = 256 if m % 256 == 0 else 128
    if m % align != 0:
        return m, m                      # full-extent blocks are always legal
    divs = _aligned_divisors(m, align)
    target_elems = max(align * align, w_tile_target_bytes // max(w_itemsize, 1))
    side = max(align, math.isqrt(target_elems))
    tk = max(d for d in divs if d <= side)
    cap_m = max(align, target_elems // tk)
    tm = max(d for d in divs if d <= cap_m)
    # Keep >=2 grid points on the parallel axes (v7x megacore: 2 TensorCores/chip).
    if a * (m // tm) < 2 and (m // 2) in divs:
        tm = m // 2
    return tm, tk


def _shrink(m, d, align):
    """Largest divisor of m that is a multiple of `align` and < d (or None)."""
    for c in range(d - align, align - 1, -align):
        if m % c == 0:
            return c
    return None


def _vmem_footprint(tm, tk, bp, w_item, x_item):
    # double-buffered W / x / out blocks + worst-case f32 accumulator scratch
    return (2 * tm * tk * w_item + 2 * bp * tk * x_item
            + 2 * bp * tm * x_item + bp * tm * 4)


# ---------------------------------------------------------------------------
# Wrappers
# ---------------------------------------------------------------------------
def constrain_assoc(w_assoc, min_val=MIN_VAL, max_val=MAX_VAL,
                    self_w=SELF_ASSOC_WEIGHT):
    """AssociationMatrix.constrain_() in plain XLA (for caching / fallback paths)."""
    m = w_assoc.shape[-1]
    w = jnp.clip(w_assoc, min_val, max_val)
    eye = jnp.eye(m, dtype=jnp.bool_)
    return jnp.where(eye, jnp.asarray(self_w, w.dtype), w)


def _icfa_pallas(x_abm, w_assoc, *, tile_m, tile_k, constrain_in_kernel):
    """y_abm[a, b, i] = sum_j W_c[a, i, j] * x_abm[a, b, j] with in-kernel constrain."""
    a, b, m = x_abm.shape
    out_dtype = x_abm.dtype
    w_item = jnp.dtype(w_assoc.dtype).itemsize
    x_item = jnp.dtype(x_abm.dtype).itemsize

    vmem_limit, w_tile_target = _vmem_budget_and_tile_target()
    bp = b + (-b % 8)                      # pad batch to a sublane multiple
    align = 256 if m % 256 == 0 else 128

    if tile_m is None and tile_k is None:
        tm, tk = _auto_tiles(m, a, w_item, w_tile_target)
        if m % align == 0:
            budget = int(vmem_limit * 0.9)
            while _vmem_footprint(tm, tk, bp, w_item, x_item) > budget:
                nxt = _shrink(m, max(tm, tk), align)
                if nxt is None:
                    break
                if tm >= tk:
                    tm = nxt
                else:
                    tk = nxt
    else:
        auto_m, auto_k = _auto_tiles(m, a, w_item, w_tile_target)
        tm = tile_m if tile_m is not None else auto_m
        tk = tile_k if tile_k is not None else auto_k
    assert m % tm == 0 and m % tk == 0, (m, tm, tk)

    if _vmem_footprint(tm, tk, bp, w_item, x_item) > vmem_limit:
        # Cannot tile to fit VMEM (e.g. huge map_units not a multiple of 128):
        # fall back to XLA rather than failing to compile.
        # TODO(synk): pad map_units to 128 for an unaligned-M Pallas path if needed.
        w_c = constrain_assoc(w_assoc) if constrain_in_kernel else w_assoc
        return jnp.einsum('aij,abj->abi', w_c, x_abm,
                          precision=jax.lax.Precision.HIGHEST).astype(out_dtype)

    if bp != b:
        x_abm = jnp.pad(x_abm, ((0, 0), (0, bp - b), (0, 0)))

    n_k = m // tk
    single_k = n_k == 1
    use_acc_scratch = (not single_k) and (jnp.dtype(out_dtype) != jnp.float32)

    kernel = functools.partial(
        _icfa_kernel, tm=tm, tk=tk,
        min_val=MIN_VAL, max_val=MAX_VAL, self_w=SELF_ASSOC_WEIGHT,
        constrain_in_kernel=constrain_in_kernel,
        use_acc_scratch=use_acc_scratch, single_k=single_k)

    scratch_shapes = [pltpu.VMEM((bp, tm), jnp.float32)] if use_acc_scratch else []

    # NOTE: the x block is re-fetched per output-row tile; negligible at small batch.
    # TODO(synk): at batch >= ~32 keep a full-K x block resident and slice in-kernel.
    y_abm = pl.pallas_call(
        kernel,
        out_shape=jax.ShapeDtypeStruct((a, bp, m), out_dtype),
        grid=(a, m // tm, n_k),
        in_specs=[
            pl.BlockSpec((1, bp, tk), lambda ai, i, k: (ai, 0, k)),   # x  (B, K tile)
            pl.BlockSpec((1, tm, tk), lambda ai, i, k: (ai, i, k)),   # W  (rows, K)
        ],
        out_specs=pl.BlockSpec((1, bp, tm), lambda ai, i, k: (ai, 0, i)),
        scratch_shapes=scratch_shapes,
        compiler_params=pltpu.CompilerParams(
            dimension_semantics=("parallel", "parallel", "arbitrary"),
            vmem_limit_bytes=vmem_limit,
        ),
    )(x_abm, w_assoc)

    return y_abm if bp == b else y_abm[:, :b, :]


def icfa_forward(x, w_assoc, *, weights_preconstrained=False,
                 tile_m=None, tile_k=None, xla_fallback_max_bytes=256 * 1024):
    """ICFA forward matching the PyTorch (batch, map_units, num_attrs) interface.

    Args:
      x:       (batch, map_units, num_attrs) or (map_units, num_attrs)
      w_assoc: (num_attrs, map_units, map_units) association matrices (raw; the
               constrain_() clip + diagonal fill is applied inside the kernel unless
               weights_preconstrained=True).
    Returns:
      Same shape/dtype as x.
    """
    is_batched = x.ndim == 3
    if not is_batched:
        x = x[None]
    b, m, a = x.shape
    assert w_assoc.shape == (a, m, m), (w_assoc.shape, (a, m, m))

    w_bytes = a * m * m * jnp.dtype(w_assoc.dtype).itemsize
    if xla_fallback_max_bytes and w_bytes <= xla_fallback_max_bytes:
        # Tiny problem: ~0.35us/grid-step overhead would dominate -> plain XLA.
        w_c = w_assoc if weights_preconstrained else constrain_assoc(w_assoc)
        y = jnp.einsum('aij,bja->bia', w_c, x,
                       precision=jax.lax.Precision.HIGHEST).astype(x.dtype)
        return y if is_batched else y[0]

    x_abm = jnp.transpose(x, (2, 0, 1))                 # (B, M, A) -> (A, B, M)
    y_abm = _icfa_pallas(x_abm, w_assoc, tile_m=tile_m, tile_k=tile_k,
                         constrain_in_kernel=not weights_preconstrained)
    y = jnp.transpose(y_abm, (1, 2, 0))                 # (A, B, M) -> (B, M, A)
    return y if is_batched else y[0]


# ---------------------------------------------------------------------------
# Init + reference + test
# ---------------------------------------------------------------------------
def init_icfa_weights(key, map_units, num_attrs, dtype=jnp.float32):
    """Mirror AssociationMatrix.__init__: uniform in [min,max], diag = self_assoc."""
    w = jax.random.uniform(key, (num_attrs, map_units, map_units), dtype=dtype,
                           minval=MIN_VAL, maxval=MAX_VAL)
    eye = jnp.eye(map_units, dtype=dtype)[None]
    return w * (1.0 - eye) + SELF_ASSOC_WEIGHT * eye


def _reference(x, w_assoc):
    """Pure-JAX reference of the PyTorch forward, in f32 / HIGHEST precision."""
    if x.ndim == 2:
        x = x[None]
    w = constrain_assoc(w_assoc).astype(jnp.float32)
    xf = x.astype(jnp.float32)
    return jnp.einsum('aij,bja->bia', w, xf, precision=jax.lax.Precision.HIGHEST)


def _max_rel_err(y, ref):
    y = jnp.asarray(y, jnp.float32)
    ref = jnp.asarray(ref, jnp.float32)
    return float(jnp.max(jnp.abs(y - ref)) / (jnp.max(jnp.abs(ref)) + 1e-12))


if __name__ == "__main__":
    key = jax.random.PRNGKey(0)
    keys = jax.random.split(key, 6)

    # --- main Pallas path: f32, in-kernel constrain -------------------------
    batch, map_units, num_attrs = 2, 256, 4
    w = init_icfa_weights(keys[0], map_units, num_attrs, jnp.float32)
    x = jax.random.normal(keys[1], (batch, map_units, num_attrs), jnp.float32)
    y = jax.block_until_ready(icfa_forward(x, w))
    ref = _reference(x, w)
    assert y.shape == x.shape
    assert _max_rel_err(y, ref) < 1e-3, f"main path rel err {_max_rel_err(y, ref)}"

    # pre-constrained (cached) weights path: in-kernel constrain compiled out
    y_pc = jax.block_until_ready(
        icfa_forward(x, constrain_assoc(w), weights_preconstrained=True))
    assert _max_rel_err(y_pc, ref) < 1e-3, "preconstrained path mismatch"

    # unbatched (2-D) input
    y2 = jax.block_until_ready(icfa_forward(x[0], w))
    assert y2.shape == (map_units, num_attrs)
    assert _max_rel_err(y2, ref[0]) < 1e-3, "unbatched path mismatch"

    # --- tiled K-accumulation path (f32 accumulates into output block) ------
    m2, a2 = 512, 2
    w2 = init_icfa_weights(keys[2], m2, a2, jnp.float32)
    x2 = jax.random.normal(keys[3], (batch, m2, a2), jnp.float32)
    y_t = jax.block_until_ready(icfa_forward(x2, w2, tile_m=128, tile_k=128))
    assert _max_rel_err(y_t, _reference(x2, w2)) < 1e-3, "tiled f32 path mismatch"

    # --- bf16 weight/activation streaming (f32 VMEM accumulator path) -------
    w_bf = w2.astype(jnp.bfloat16)
    x_bf = x2.astype(jnp.bfloat16)
    y_bf = jax.block_until_ready(icfa_forward(x_bf, w_bf, tile_m=128, tile_k=128))
    assert y_bf.dtype == jnp.bfloat16
    assert _max_rel_err(y_bf, _reference(x_bf, w_bf)) < 3e-2, "bf16 path mismatch"

    # --- tiny problem: default -> XLA fallback; forced Pallas (full blocks) --
    m3, a3 = 16, 4
    w3 = init_icfa_weights(keys[4], m3, a3, jnp.float32)
    x3 = jax.random.normal(keys[5], (batch, m3, a3), jnp.float32)
    ref3 = _reference(x3, w3)
    y_s = jax.block_until_ready(icfa_forward(x3, w3))                          # XLA
    y_sp = jax.block_until_ready(icfa_forward(x3, w3, xla_fallback_max_bytes=0))  # Pallas
    assert _max_rel_err(y_s, ref3) < 1e-3, "small-problem XLA fallback mismatch"
    assert _max_rel_err(y_sp, ref3) < 1e-3, "small-problem Pallas path mismatch"

    print("KERNEL_OK")
</pallas_src>

<mosaic_0001>
module attributes {stable_mosaic.version = 11 : i64} {
  func.func @_icfa_kernel(%arg0: i32, %arg1: i32, %arg2: i32, %arg3: memref<1x8x256xf32, #tpu.memory_space<vmem>>, %arg4: memref<1x256x256xf32, #tpu.memory_space<vmem>>, %arg5: memref<1x8x256xf32, #tpu.memory_space<vmem>>) attributes {dimension_semantics = [#tpu.dimension_semantics<parallel>, #tpu.dimension_semantics<parallel>, #tpu.dimension_semantics<arbitrary>], iteration_bounds = array<i64: 4, 1, 1>, scalar_prefetch = 0 : i64, scratch_operands = 0 : i64, tpu.core_type = #tpu.core_type<tc>, window_params = [{transform_indices = @transform_0, window_bounds = array<i64: 1, 8, 256>}, {transform_indices = @transform_1, window_bounds = array<i64: 1, 256, 256>}, {transform_indices = @transform_2, window_bounds = array<i64: 1, 8, 256>}]} {
    %c0 = arith.constant 0 : index
    %c0_0 = arith.constant 0 : index
    %c0_1 = arith.constant 0 : index
    %0 = vector.load %arg4[%c0, %c0_0, %c0_1] : memref<1x256x256xf32, #tpu.memory_space<vmem>>, vector<1x256x256xf32>
    %1 = vector.shape_cast %0 : vector<1x256x256xf32> to vector<256x256xf32>
    %cst = arith.constant -1.000000e+00 : f32
    %cst_2 = arith.constant 1.000000e+00 : f32
    %2 = vector.broadcast %cst : f32 to vector<256x256xf32>
    %3 = arith.maximumf %2, %1 : vector<256x256xf32>
    %4 = vector.broadcast %cst_2 : f32 to vector<256x256xf32>
    %5 = arith.minimumf %4, %3 : vector<256x256xf32>
    %6 = tpu.iota {dimensions = array<i32: 0>} : vector<256x256xi32>
    %7 = tpu.iota {dimensions = array<i32: 1>} : vector<256x256xi32>
    %8 = arith.subi %6, %7 : vector<256x256xi32>
    %c256_i32 = arith.constant 256 : i32
    %9 = arith.muli %arg2, %c256_i32 : i32
    %c256_i32_3 = arith.constant 256 : i32
    %10 = arith.muli %arg1, %c256_i32_3 : i32
    %11 = arith.subi %9, %10 : i32
    %12 = vector.broadcast %11 : i32 to vector<256x256xi32>
    %13 = arith.cmpi eq, %8, %12 : vector<256x256xi32>
    %cst_4 = arith.constant 1.000000e+00 : f32
    %14 = vector.broadcast %cst_4 : f32 to vector<256x256xf32>
    %15 = arith.select %13, %14, %5 : vector<256x256xi1>, vector<256x256xf32>
    %c0_5 = arith.constant 0 : index
    %c0_6 = arith.constant 0 : index
    %c0_7 = arith.constant 0 : index
    %16 = vector.load %arg3[%c0_5, %c0_6, %c0_7] : memref<1x8x256xf32, #tpu.memory_space<vmem>>, vector<1x8x256xf32>
    %17 = vector.shape_cast %16 : vector<1x8x256xf32> to vector<8x256xf32>
    %cst_8 = arith.constant dense<0.000000e+00> : vector<8x256xf32>
    %18 = tpu.matmul %17, %15, %cst_8 {dimension_numbers = #tpu.dot_dimension_numbers<[1], [1], [0], [0], [0, 0, 1, 0], [], []>} : vector<8x256xf32>, vector<256x256xf32>, vector<8x256xf32> -> vector<8x256xf32>
    %c0_9 = arith.constant 0 : index
    %c0_10 = arith.constant 0 : index
    %c0_11 = arith.constant 0 : index
    %19 = vector.load %arg5[%c0_9, %c0_10, %c0_11] : memref<1x8x256xf32, #tpu.memory_space<vmem>>, vector<1x8x256xf32>
    %20 = vector.shape_cast %19 : vector<1x8x256xf32> to vector<8x256xf32>
    %21 = vector.shape_cast %18 : vector<8x256xf32> to vector<1x8x256xf32>
    tpu.vector_store %arg5[%c0_9, %c0_10, %c0_11], %21 {strides = array<i32>} : memref<1x8x256xf32, #tpu.memory_space<vmem>>, vector<1x8x256xf32>,
    return
  }
  func.func @transform_0(%arg0: i32, %arg1: i32, %arg2: i32) -> (i32, i32, i32) {
    %c0_i32 = arith.constant 0 : i32
    %c0_i32_0 = arith.constant 0 : i32
    return %arg0, %c0_i32, %arg2 : i32, i32, i32
  }
  func.func @transform_1(%arg0: i32, %arg1: i32, %arg2: i32) -> (i32, i32, i32) {
    %c0_i32 = arith.constant 0 : i32
    return %arg0, %arg1, %arg2 : i32, i32, i32
  }
  func.func @transform_2(%arg0: i32, %arg1: i32, %arg2: i32) -> (i32, i32, i32) {
    %c0_i32 = arith.constant 0 : i32
    %c0_i32_0 = arith.constant 0 : i32
    return %arg0, %c0_i32, %arg1 : i32, i32, i32
  }
}

</mosaic_0001>

<llo_original>
// kernel: tpu_custom_call.1
$region0: #{tpu_custom_call.1}
  #allocation0 [shape = 'u32[]', space=smem, size = 0x4, offset = 0x4, fixed_abs, tag = 'smem constant byte address 0x4 - core index']
  #allocation1 [shape = 'u32[72,128]{1,0:T(1,128)}', space=vmem, size = 0x9000, scoped, tag = 'internal scratch']
  %s0 = inlined_call_operand.hbm [shape: f32[4,8,256], index: 0, kind: input, shape index: {}]
  %s1 = inlined_call_operand.hbm [shape: f32[4,256,256], index: 1, kind: input, shape index: {}]
  %s2 = inlined_call_operand.hbm [shape: f32[4,8,256], index: 2, kind: output, shape index: {}]
  %s3 = sld [smem:[#allocation0]]
  $region49: #{tpu_custom_call.1} parent=0
    _
  %s5 = ssub.s32 1, %s3
  %s6 = scalar_select 0, %s5, %s3
  $region1: #{tpu_custom_call.1} parent=0
    #allocation2 [shape = 'u8[16384]{0}', space=vmem, size = 0x4000, scoped, tag = 'input window, operand 0']
    #allocation3 [shape = 's32[2]{0}', space=sflag, size = 0x8, scoped, tag = 'scoped memory for tpu_custom_call.1']
    #allocation4 [shape = 's32[2]{0}', space=sflag, size = 0x8, scoped, tag = 'scoped memory for tpu_custom_call.1']
    #allocation5 [shape = 'u8[524288]{0}', space=vmem, size = 0x80000, scoped, tag = 'input window, operand 1']
    #allocation6 [shape = 's32[2]{0}', space=sflag, size = 0x8, scoped, tag = 'scoped memory for tpu_custom_call.1']
    #allocation7 [shape = 'u8[16384]{0}', space=vmem, size = 0x4000, scoped, tag = 'output window, operand 0']
    %7 = vsyncpa [#allocation3], 0
    %s8 = scalar_lea.sflag [#allocation3], 1
    %9 = vsyncpa %s8, 0
    %10 = vsyncpa [#allocation6], 0
    %s11 = scalar_lea.sflag [#allocation6], 1
    %12 = vsyncpa %s11, 0
    %13 = vsyncpa [#allocation4], 0
    %s14 = scalar_lea.sflag [#allocation4], 1
    %15 = vsyncpa %s14, 0
    loop: start=0, step=1, limit=6
    $region2: #{tpu_custom_call.1} parent=1 // loop_pre_header
      _
    $region3: #{tpu_custom_call.1} parent=1 // loop_header
      %s17 = sphi 0, %s21
      %p18 = scmp.ge.s32.totalorder %s17, 6
      %s24 = sphi 0, %s43
      %s25 = sphi 0, %s39
      %s26 = sphi 0, %s35
      %s27 = sphi 0, %s24
      %s28 = sphi 0, %s25
      %s29 = sphi 0, %s26
      %s30 = sphi 0, %s27
      %s31 = sphi 0, %s28
      %s32 = sphi 0, %s29
      %s48 = sphi 0, %s50
      %s51 = sphi 0, %s48
      %s52 = sphi 0, %s51
      %s68 = sphi 0, %s52
      %s78 = sphi 0, %s80
      %s81 = sphi 0, %s78
      %s82 = sphi 0, %s81
      %s98 = sphi 0, %s82
      %s106 = sphi 0, %s108
      %s109 = sphi 0, %s106
      %s110 = sphi 0, %s109
      %s126 = sphi 0, %s110
    $region4: #{tpu_custom_call.1} parent=1 // loop_header_branch
      %20 = sbr.rel (%p18) target = $region8
    $region5: #{tpu_custom_call.1} parent=1 // loop_body
      %s22 = ssub.s32 %s17, 1
      %s23 = ssub.s32 %s17, 2
      %s33 = sadd.s32 1, %s26
      %p34 = scmp.ge.s32.totalorder %s33, 1
      %s35 = scalar_select %p34, 0, %s33
      %s36 = sadd.s32 1, %s25
      %s37 = scalar_select %p34, %s36, %s25
      %p38 = scmp.ge.s32.totalorder %s37, 1
      %s39 = scalar_select %p38, 0, %s37
      %s40 = sadd.s32 1, %s24
      %s41 = scalar_select %p38, %s40, %s24
      %p42 = scmp.ge.s32.totalorder %s41, 4
      %s43 = scalar_select %p42, 0, %s41
      %s44 = ssub.s32 %s24, %s43
      %s45 = ssub.s32 %s26, %s35
      %s46 = sor.u32 %s44, %s45
      %p47 = scmp.eq.s32.totalorder %s46, 0
      %s49 = sadd.s32 %s48, 1
      %s50 = scalar_select %p47, %s48, %s49
      %p53 = pneg %p47
      %p54 = scmp.eq.s32.totalorder %s17, 3
      %p55 = por %p53, %p54
      %p56 = scmp.ne.s32.totalorder %s48, %s51
      %p57 = scmp.eq.s32.totalorder %s17, 0
      %p58 = por %p56, %p57
      %p59 = scmp.ne.s32.totalorder %s48, %s51
      %p60 = scmp.eq.s32.totalorder %s22, 3
      %p61 = por %p59, %p60
      %p62 = scmp.ne.s32.totalorder %s51, %s52
      %p63 = scmp.eq.s32.totalorder %s22, 0
      %p64 = por %p62, %p63
      %p65 = scmp.ne.s32.totalorder %s51, %s52
      %p66 = scmp.eq.s32.totalorder %s23, 3
      %p67 = por %p65, %p66
      %p69 = scmp.ne.s32.totalorder %s52, %s68
      %p70 = scmp.eq.s32.totalorder %s23, 0
      %p71 = por %p69, %p70
      %s72 = ssub.s32 %s24, %s43
      %s73 = ssub.s32 %s25, %s39
      %s74 = sor.u32 %s72, %s73
      %s75 = ssub.s32 %s26, %s35
      %s76 = sor.u32 %s74, %s75
      %p77 = scmp.eq.s32.totalorder %s76, 0
      %s79 = sadd.s32 %s78, 1
      %s80 = scalar_select %p77, %s78, %s79
      %p83 = pneg %p77
      %p84 = scmp.eq.s32.totalorder %s17, 3
      %p85 = por %p83, %p84
      %p86 = scmp.ne.s32.totalorder %s78, %s81
      %p87 = scmp.eq.s32.totalorder %s17, 0
      %p88 = por %p86, %p87
      %p89 = scmp.ne.s32.totalorder %s78, %s81
      %p90 = scmp.eq.s32.totalorder %s22, 3
      %p91 = por %p89, %p90
      %p92 = scmp.ne.s32.totalorder %s81, %s82
      %p93 = scmp.eq.s32.totalorder %s22, 0
      %p94 = por %p92, %p93
      %p95 = scmp.ne.s32.totalorder %s81, %s82
      %p96 = scmp.eq.s32.totalorder %s23, 3
      %p97 = por %p95, %p96
      %p99 = scmp.ne.s32.totalorder %s82, %s98
      %p100 = scmp.eq.s32.totalorder %s23, 0
      %p101 = por %p99, %p100
      %s102 = ssub.s32 %s24, %s43
      %s103 = ssub.s32 %s25, %s39
      %s104 = sor.u32 %s102, %s103
      %p105 = scmp.eq.s32.totalorder %s104, 0
      %s107 = sadd.s32 %s106, 1
      %s108 = scalar_select %p105, %s106, %s107
      %p111 = pneg %p105
      %p112 = scmp.eq.s32.totalorder %s17, 3
      %p113 = por %p111, %p112
      %p114 = scmp.ne.s32.totalorder %s106, %s109
      %p115 = scmp.eq.s32.totalorder %s17, 0
      %p116 = por %p114, %p115
      %p117 = scmp.ne.s32.totalorder %s106, %s109
      %p118 = scmp.eq.s32.totalorder %s22, 3
      %p119 = por %p117, %p118
      %p120 = scmp.ne.s32.totalorder %s109, %s110
      %p121 = scmp.eq.s32.totalorder %s22, 0
      %p122 = por %p120, %p121
      %p123 = scmp.ne.s32.totalorder %s109, %s110
      %p124 = scmp.eq.s32.totalorder %s23, 3
      %p125 = por %p123, %p124
      %p127 = scmp.ne.s32.totalorder %s110, %s126
      %p128 = scmp.eq.s32.totalorder %s23, 0
      %p129 = por %p127, %p128
      %p130 = scmp.le.s32.totalorder 1, %s17
      %p131 = scmp.lt.s32.totalorder %s17, 5
      %p132 = pnand %p130, %p131
      %p133 = pneg %p132
      // Predicated region
      $region9: #{tpu_custom_call.1} parent=5 // pred_check
        _
      $region10: #{tpu_custom_call.1} parent=5 // pred_check_branch
        %135 = sbr.rel (%p132) target = $region12
      $region11: #{tpu_custom_call.1} parent=5 // pred_region
        %s136 = ssub.s32 %s17, 1
      $region12: #{tpu_custom_call.1} parent=5 // pred_fallthru
        _
      %p137 = scmp.lt.s32.totalorder %s17, 4
      // Predicated region
      $region13: #{tpu_custom_call.1} parent=5 // pred_check
        %p138 = pneg %p137
      $region14: #{tpu_custom_call.1} parent=5 // pred_check_branch
        %140 = sbr.rel (%p138) target = $region16
      $region15: #{tpu_custom_call.1} parent=5 // pred_region
        // Predicated region
        $region17: #{tpu_custom_call.1} parent=15 // pred_check
          %p141 = pneg %p58
        $region18: #{tpu_custom_call.1} parent=15 // pred_check_branch
          %143 = sbr.rel (%p141) target = $region20
        $region19: #{tpu_custom_call.1} parent=15 // pred_region
          %s144 = sand.u32 %s48, 1
          %s145 = scalar_lea.sflag [#allocation3], %s144
          %s146 = sand.u32 %s48, 1
          %s147 = smul.addr %s146, 16
          %s148 = scalar_lea.vmem [#allocation2], %s147
          %s149 = smul.u32 2, %s26
          %151 = vsyncadd %s145, 0
          %s152 = smul.addr %s24, 2
          %s153 = sadd.s32 %s149, %s152
          %s154 = smul.addr %s153, 8
          %s155 = scalar_lea.hbm %s0, %s154
          %s157 = sshll.u32 %s155, 4
          %s158 = int_to_ptr.hbm [resolvable:$true] %s157
          %s159 = sshll.u32 %s148, 4
          %s160 = int_to_ptr.vmem [resolvable:$true] %s159
          %162 = dma.hbm_to_vmem [thread:$0]  %s158, 256, %s160, %s145
        $region20: #{tpu_custom_call.1} parent=15 // pred_fallthru
          _
        // Predicated region
        $region21: #{tpu_custom_call.1} parent=15 // pred_check
          %p163 = pneg %p88
        $region22: #{tpu_custom_call.1} parent=15 // pred_check_branch
          %165 = sbr.rel (%p163) target = $region24
        $region23: #{tpu_custom_call.1} parent=15 // pred_region
          %s166 = sand.u32 %s78, 1
          %s167 = scalar_lea.sflag [#allocation6], %s166
          %s168 = sand.u32 %s78, 1
          %s169 = smul.addr %s168, 512
          %s170 = scalar_lea.vmem [#allocation5], %s169
          %s171 = smul.u32 32, %s25
          %s172 = smul.u32 2, %s26
          %174 = vsyncadd %s167, 0
          %s175 = smul.addr %s171, 2
          %s176 = sadd.s32 %s172, %s175
          %s177 = smul.addr %s24, 64
          %s178 = sadd.s32 %s176, %s177
          %s179 = smul.addr %s178, 8
          %s180 = scalar_lea.hbm %s1, %s179
          %s181 = sshll.u32 %s180, 4
          %s182 = int_to_ptr.hbm [resolvable:$true] %s181
          %s183 = sshll.u32 %s170, 4
          %s184 = int_to_ptr.vmem [resolvable:$true] %s183
          %189 = dma.hbm_to_vmem [thread:$0]  %s182, 8192, %s184, %s167, 256, 256, 16
        $region24: #{tpu_custom_call.1} parent=15 // pred_fallthru
          _
      $region16: #{tpu_custom_call.1} parent=5 // pred_fallthru
        _
      %p190 = scmp.le.s32.totalorder 1, %s17
      %p191 = scmp.lt.s32.totalorder %s17, 5
      %p192 = pnand %p190, %p191
      %p193 = pneg %p192
      // Predicated region
      $region25: #{tpu_custom_call.1} parent=5 // pred_check
        _
      $region26: #{tpu_custom_call.1} parent=5 // pred_check_branch
        %195 = sbr.rel (%p192) target = $region28
      $region27: #{tpu_custom_call.1} parent=5 // pred_region
        %s196 = ssub.s32 %s17, 1
        %s197 = sand.u32 %s51, 1
        %s198 = scalar_lea.sflag [#allocation3], %s197
        %s199 = sand.u32 %s51, 1
        %s200 = smul.addr %s199, 16
        %s201 = scalar_lea.vmem [#allocation2], %s200
        // Predicated region
        $region29: #{tpu_custom_call.1} parent=27 // pred_check
          %p202 = pneg %p64
        $region30: #{tpu_custom_call.1} parent=27 // pred_check_branch
          %204 = sbr.rel (%p202) target = $region32
        $region31: #{tpu_custom_call.1} parent=27 // pred_region
          %206 = dma.done %s198, 256
        $region32: #{tpu_custom_call.1} parent=27 // pred_fallthru
          _
        %s207 = sand.u32 %s81, 1
        %s208 = scalar_lea.sflag [#allocation6], %s207
        %s209 = sand.u32 %s81, 1
        %s210 = smul.addr %s209, 512
        %s211 = scalar_lea.vmem [#allocation5], %s210
        // Predicated region
        $region33: #{tpu_custom_call.1} parent=27 // pred_check
          %p212 = pneg %p94
        $region34: #{tpu_custom_call.1} parent=27 // pred_check_branch
          %214 = sbr.rel (%p212) target = $region36
        $region35: #{tpu_custom_call.1} parent=27 // pred_region
          %216 = dma.done %s208, 8192
        $region36: #{tpu_custom_call.1} parent=27 // pred_fallthru
          _
        %s217 = sand.u32 %s51, 1
        %s218 = scalar_lea.sflag [#allocation3], %s217
        %s219 = sand.u32 %s51, 1
        %s220 = smul.addr %s219, 16
        %s221 = scalar_lea.vmem [#allocation2], %s220
        %p222 = pneg %p64
        %p223 = pneg %p61
        %s224 = sand.u32 %s81, 1
        %s225 = scalar_lea.sflag [#allocation6], %s224
        %s226 = sand.u32 %s81, 1
        %s227 = smul.addr %s226, 512
        %s228 = scalar_lea.vmem [#allocation5], %s227
        %p229 = pneg %p94
        %p230 = pneg %p91
        %p231 = pneg %p122
        %p232 = pneg %p119
        %s233 = sand.u32 %s109, 1
        %s234 = scalar_lea.sflag [#allocation4], %s233
        %s235 = sand.u32 %s109, 1
        %s236 = smul.addr %s235, 16
        %s237 = scalar_lea.vmem [#allocation7], %s236
        %s238 = smul.u32 2, %s29
        %s239 = smul.u32 32, %s28
        %s240 = smul.u32 2, %s29
        %s241 = smul.u32 2, %s28
        %v242 = vld [vmem:[%s211] sm:$0xff]
        %v243 = vld [vmem:[%s211 + $0x8] sm:$0xff]
        %v244 = vld [vmem:[%s211 + $0x10] sm:$0xff]
        %v245 = vld [vmem:[%s211 + $0x18] sm:$0xff]
        %v246 = vld [vmem:[%s211 + $0x20] sm:$0xff]
        %v247 = vld [vmem:[%s211 + $0x28] sm:$0xff]
        %v248 = vld [vmem:[%s211 + $0x30] sm:$0xff]
        %v249 = vld [vmem:[%s211 + $0x38] sm:$0xff]
        %v250 = vld [vmem:[%s211 + $0x40] sm:$0xff]
        %v251 = vld [vmem:[%s211 + $0x48] sm:$0xff]
        %v252 = vld [vmem:[%s211 + $0x50] sm:$0xff]
        %v253 = vld [vmem:[%s211 + $0x58] sm:$0xff]
        %v254 = vld [vmem:[%s211 + $0x60] sm:$0xff]
        %v255 = vld [vmem:[%s211 + $0x68] sm:$0xff]
        %v256 = vld [vmem:[%s211 + $0x70] sm:$0xff]
        %v257 = vld [vmem:[%s211 + $0x78] sm:$0xff]
        %v258 = vld [vmem:[%s211 + $0x80] sm:$0xff]
        %v259 = vld [vmem:[%s211 + $0x88] sm:$0xff]
        %v260 = vld [vmem:[%s211 + $0x90] sm:$0xff]
        %v261 = vld [vmem:[%s211 + $0x98] sm:$0xff]
        %v262 = vld [vmem:[%s211 + $0xa0] sm:$0xff]
        %v263 = vld [vmem:[%s211 + $0xa8] sm:$0xff]
        %v264 = vld [vmem:[%s211 + $0xb0] sm:$0xff]
        %v265 = vld [vmem:[%s211 + $0xb8] sm:$0xff]
        %v266 = vld [vmem:[%s211 + $0xc0] sm:$0xff]
        %v267 = vld [vmem:[%s211 + $0xc8] sm:$0xff]
        %v268 = vld [vmem:[%s211 + $0xd0] sm:$0xff]
        %v269 = vld [vmem:[%s211 + $0xd8] sm:$0xff]
        %v270 = vld [vmem:[%s211 + $0xe0] sm:$0xff]
        %v271 = vld [vmem:[%s211 + $0xe8] sm:$0xff]
        %v272 = vld [vmem:[%s211 + $0xf0] sm:$0xff]
        %v273 = vld [vmem:[%s211 + $0xf8] sm:$0xff]
        %v274 = vld [vmem:[%s211 + $0x100] sm:$0xff]
        %v275 = vld [vmem:[%s211 + $0x108] sm:$0xff]
        %v276 = vld [vmem:[%s211 + $0x110] sm:$0xff]
        %v277 = vld [vmem:[%s211 + $0x118] sm:$0xff]
        %v278 = vld [vmem:[%s211 + $0x120] sm:$0xff]
        %v279 = vld [vmem:[%s211 + $0x128] sm:$0xff]
        %v280 = vld [vmem:[%s211 + $0x130] sm:$0xff]
        %v281 = vld [vmem:[%s211 + $0x138] sm:$0xff]
        %v282 = vld [vmem:[%s211 + $0x140] sm:$0xff]
        %v283 = vld [vmem:[%s211 + $0x148] sm:$0xff]
        %v284 = vld [vmem:[%s211 + $0x150] sm:$0xff]
        %v285 = vld [vmem:[%s211 + $0x158] sm:$0xff]
        %v286 = vld [vmem:[%s211 + $0x160] sm:$0xff]
        %v287 = vld [vmem:[%s211 + $0x168] sm:$0xff]
        %v288 = vld [vmem:[%s211 + $0x170] sm:$0xff]
        %v289 = vld [vmem:[%s211 + $0x178] sm:$0xff]
        %v290 = vld [vmem:[%s211 + $0x180] sm:$0xff]
        %v291 = vld [vmem:[%s211 + $0x188] sm:$0xff]
        %v292 = vld [vmem:[%s211 + $0x190] sm:$0xff]
        %v293 = vld [vmem:[%s211 + $0x198] sm:$0xff]
        %v294 = vld [vmem:[%s211 + $0x1a0] sm:$0xff]
        %v295 = vld [vmem:[%s211 + $0x1a8] sm:$0xff]
        %v296 = vld [vmem:[%s211 + $0x1b0] sm:$0xff]
        %v297 = vld [vmem:[%s211 + $0x1b8] sm:$0xff]
        %v298 = vld [vmem:[%s211 + $0x1c0] sm:$0xff]
        %v299 = vld [vmem:[%s211 + $0x1c8] sm:$0xff]
        %v300 = vld [vmem:[%s211 + $0x1d0] sm:$0xff]
        %v301 = vld [vmem:[%s211 + $0x1d8] sm:$0xff]
        %v302 = vld [vmem:[%s211 + $0x1e0] sm:$0xff]
        %v303 = vld [vmem:[%s211 + $0x1e8] sm:$0xff]
        %v304 = vld [vmem:[%s211 + $0x1f0] sm:$0xff]
        %v305 = vld [vmem:[%s211 + $0x1f8] sm:$0xff]
        %v306 = vmax.f32 %v242, -1.0
        %v307 = vmax.f32 %v243, -1.0
        %v308 = vmax.f32 %v244, -1.0
        %v309 = vmax.f32 %v245, -1.0
        %v310 = vmax.f32 %v246, -1.0
        %v311 = vmax.f32 %v247, -1.0
        %v312 = vmax.f32 %v248, -1.0
        %v313 = vmax.f32 %v249, -1.0
        %v314 = vmax.f32 %v250, -1.0
        %v315 = vmax.f32 %v251, -1.0
        %v316 = vmax.f32 %v252, -1.0
        %v317 = vmax.f32 %v253, -1.0
        %v318 = vmax.f32 %v254, -1.0
        %v319 = vmax.f32 %v255, -1.0
        %v320 = vmax.f32 %v256, -1.0
        %v321 = vmax.f32 %v257, -1.0
        %v322 = vmax.f32 %v258, -1.0
        %v323 = vmax.f32 %v259, -1.0
        %v324 = vmax.f32 %v260, -1.0
        %v325 = vmax.f32 %v261, -1.0
        %v326 = vmax.f32 %v262, -1.0
        %v327 = vmax.f32 %v263, -1.0
        %v328 = vmax.f32 %v264, -1.0
        %v329 = vmax.f32 %v265, -1.0
        %v330 = vmax.f32 %v266, -1.0
        %v331 = vmax.f32 %v267, -1.0
        %v332 = vmax.f32 %v268, -1.0
        %v333 = vmax.f32 %v269, -1.0
        %v334 = vmax.f32 %v270, -1.0
        %v335 = vmax.f32 %v271, -1.0
        %v336 = vmax.f32 %v272, -1.0
        %v337 = vmax.f32 %v273, -1.0
        %v338 = vmax.f32 %v274, -1.0
        %v339 = vmax.f32 %v275, -1.0
        %v340 = vmax.f32 %v276, -1.0
        %v341 = vmax.f32 %v277, -1.0
        %v342 = vmax.f32 %v278, -1.0
        %v343 = vmax.f32 %v279, -1.0
        %v344 = vmax.f32 %v280, -1.0
        %v345 = vmax.f32 %v281, -1.0
        %v346 = vmax.f32 %v282, -1.0
        %v347 = vmax.f32 %v283, -1.0
        %v348 = vmax.f32 %v284, -1.0
        %v349 = vmax.f32 %v285, -1.0
        %v350 = vmax.f32 %v286, -1.0
        %v351 = vmax.f32 %v287, -1.0
        %v352 = vmax.f32 %v288, -1.0
        %v353 = vmax.f32 %v289, -1.0
        %v354 = vmax.f32 %v290, -1.0
        %v355 = vmax.f32 %v291, -1.0
        %v356 = vmax.f32 %v292, -1.0
        %v357 = vmax.f32 %v293, -1.0
        %v358 = vmax.f32 %v294, -1.0
        %v359 = vmax.f32 %v295, -1.0
        %v360 = vmax.f32 %v296, -1.0
        %v361 = vmax.f32 %v297, -1.0
        %v362 = vmax.f32 %v298, -1.0
        %v363 = vmax.f32 %v299, -1.0
        %v364 = vmax.f32 %v300, -1.0
        %v365 = vmax.f32 %v301, -1.0
        %v366 = vmax.f32 %v302, -1.0
        %v367 = vmax.f32 %v303, -1.0
        %v368 = vmax.f32 %v304, -1.0
        %v369 = vmax.f32 %v305, -1.0
        %v370 = vmin.f32 %v306, 1.0
        %v371 = vmin.f32 %v307, 1.0
        %v372 = vmin.f32 %v308, 1.0
        %v373 = vmin.f32 %v309, 1.0
        %v374 = vmin.f32 %v310, 1.0
        %v375 = vmin.f32 %v311, 1.0
        %v376 = vmin.f32 %v312, 1.0
        %v377 = vmin.f32 %v313, 1.0
        %v378 = vmin.f32 %v314, 1.0
        %v379 = vmin.f32 %v315, 1.0
        %v380 = vmin.f32 %v316, 1.0
        %v381 = vmin.f32 %v317, 1.0
        %v382 = vmin.f32 %v318, 1.0
        %v383 = vmin.f32 %v319, 1.0
        %v384 = vmin.f32 %v320, 1.0
        %v385 = vmin.f32 %v321, 1.0
        %v386 = vmin.f32 %v322, 1.0
        %v387 = vmin.f32 %v323, 1.0
        %v388 = vmin.f32 %v324, 1.0
        %v389 = vmin.f32 %v325, 1.0
        %v390 = vmin.f32 %v326, 1.0
        %v391 = vmin.f32 %v327, 1.0
        %v392 = vmin.f32 %v328, 1.0
        %v393 = vmin.f32 %v329, 1.0
        %v394 = vmin.f32 %v330, 1.0
        %v395 = vmin.f32 %v331, 1.0
        %v396 = vmin.f32 %v332, 1.0
        %v397 = vmin.f32 %v333, 1.0
        %v398 = vmin.f32 %v334, 1.0
        %v399 = vmin.f32 %v335, 1.0
        %v400 = vmin.f32 %v336, 1.0
        %v401 = vmin.f32 %v337, 1.0
        %v402 = vmin.f32 %v338, 1.0
        %v403 = vmin.f32 %v339, 1.0
        %v404 = vmin.f32 %v340, 1.0
        %v405 = vmin.f32 %v341, 1.0
        %v406 = vmin.f32 %v342, 1.0
        %v407 = vmin.f32 %v343, 1.0
        %v408 = vmin.f32 %v344, 1.0
        %v409 = vmin.f32 %v345, 1.0
        %v410 = vmin.f32 %v346, 1.0
        %v411 = vmin.f32 %v347, 1.0
        %v412 = vmin.f32 %v348, 1.0
        %v413 = vmin.f32 %v349, 1.0
        %v414 = vmin.f32 %v350, 1.0
        %v415 = vmin.f32 %v351, 1.0
        %v416 = vmin.f32 %v352, 1.0
        %v417 = vmin.f32 %v353, 1.0
        %v418 = vmin.f32 %v354, 1.0
        %v419 = vmin.f32 %v355, 1.0
        %v420 = vmin.f32 %v356, 1.0
        %v421 = vmin.f32 %v357, 1.0
        %v422 = vmin.f32 %v358, 1.0
        %v423 = vmin.f32 %v359, 1.0
        %v424 = vmin.f32 %v360, 1.0
        %v425 = vmin.f32 %v361, 1.0
        %v426 = vmin.f32 %v362, 1.0
        %v427 = vmin.f32 %v363, 1.0
        %v428 = vmin.f32 %v364, 1.0
        %v429 = vmin.f32 %v365, 1.0
        %v430 = vmin.f32 %v366, 1.0
        %v431 = vmin.f32 %v367, 1.0
        %v432 = vmin.f32 %v368, 1.0
        %v433 = vmin.f32 %v369, 1.0
        %v434 = vlaneseq
        %v435 = vshrl.u32 %v434, 7
        %v436 = vadd.s32 %v435, 8
        %v437 = vadd.s32 %v435, 16
        %v438 = vadd.s32 %v435, 24
        %v439 = vadd.s32 %v435, 32
        %v440 = vadd.s32 %v435, 40
        %v441 = vadd.s32 %v435, 48
        %v442 = vadd.s32 %v435, 56
        %v443 = vadd.s32 %v435, 64
        %v444 = vadd.s32 %v435, 72
        %v445 = vadd.s32 %v435, 80
        %v446 = vadd.s32 %v435, 88
        %v447 = vadd.s32 %v435, 96
        %v448 = vadd.s32 %v435, 104
        %v449 = vadd.s32 %v435, 112
        %v450 = vadd.s32 %v435, 120
        %v451 = vadd.s32 %v435, 128
        %v452 = vadd.s32 %v435, 136
        %v453 = vadd.s32 %v435, 144
        %v454 = vadd.s32 %v435, 152
        %v455 = vadd.s32 %v435, 160
        %v456 = vadd.s32 %v435, 168
        %v457 = vadd.s32 %v435, 176
        %v458 = vadd.s32 %v435, 184
        %v459 = vadd.s32 %v435, 192
        %v460 = vadd.s32 %v435, 200
        %v461 = vadd.s32 %v435, 208
        %v462 = vadd.s32 %v435, 216
        %v463 = vadd.s32 %v435, 224
        %v464 = vadd.s32 %v435, 232
        %v465 = vadd.s32 %v435, 240
        %v466 = vadd.s32 %v435, 248
        %v467 = vlaneseq
        %v468 = vand.u32 %v467, 127
        %v469 = vadd.s32 %v468, 128
        %v470 = vsub.s32 %v435, %v468
        %v471 = vsub.s32 %v435, %v469
        %v472 = vsub.s32 %v436, %v468
        %v473 = vsub.s32 %v436, %v469
        %v474 = vsub.s32 %v437, %v468
        %v475 = vsub.s32 %v437, %v469
        %v476 = vsub.s32 %v438, %v468
        %v477 = vsub.s32 %v438, %v469
        %v478 = vsub.s32 %v439, %v468
        %v479 = vsub.s32 %v439, %v469
        %v480 = vsub.s32 %v440, %v468
        %v481 = vsub.s32 %v440, %v469
        %v482 = vsub.s32 %v441, %v468
        %v483 = vsub.s32 %v441, %v469
        %v484 = vsub.s32 %v442, %v468
        %v485 = vsub.s32 %v442, %v469
        %v486 = vsub.s32 %v443, %v468
        %v487 = vsub.s32 %v443, %v469
        %v488 = vsub.s32 %v444, %v468
        %v489 = vsub.s32 %v444, %v469
        %v490 = vsub.s32 %v445, %v468
        %v491 = vsub.s32 %v445, %v469
        %v492 = vsub.s32 %v446, %v468
        %v493 = vsub.s32 %v446, %v469
        %v494 = vsub.s32 %v447, %v468
        %v495 = vsub.s32 %v447, %v469
        %v496 = vsub.s32 %v448, %v468
        %v497 = vsub.s32 %v448, %v469
        %v498 = vsub.s32 %v449, %v468
        %v499 = vsub.s32 %v449, %v469
        %v500 = vsub.s32 %v450, %v468
        %v501 = vsub.s32 %v450, %v469
        %v502 = vsub.s32 %v451, %v468
        %v503 = vsub.s32 %v451, %v469
        %v504 = vsub.s32 %v452, %v468
        %v505 = vsub.s32 %v452, %v469
        %v506 = vsub.s32 %v453, %v468
        %v507 = vsub.s32 %v453, %v469
        %v508 = vsub.s32 %v454, %v468
        %v509 = vsub.s32 %v454, %v469
        %v510 = vsub.s32 %v455, %v468
        %v511 = vsub.s32 %v455, %v469
        %v512 = vsub.s32 %v456, %v468
        %v513 = vsub.s32 %v456, %v469
        %v514 = vsub.s32 %v457, %v468
        %v515 = vsub.s32 %v457, %v469
        %v516 = vsub.s32 %v458, %v468
        %v517 = vsub.s32 %v458, %v469
        %v518 = vsub.s32 %v459, %v468
        %v519 = vsub.s32 %v459, %v469
        %v520 = vsub.s32 %v460, %v468
        %v521 = vsub.s32 %v460, %v469
        %v522 = vsub.s32 %v461, %v468
        %v523 = vsub.s32 %v461, %v469
        %v524 = vsub.s32 %v462, %v468
        %v525 = vsub.s32 %v462, %v469
        %v526 = vsub.s32 %v463, %v468
        %v527 = vsub.s32 %v463, %v469
        %v528 = vsub.s32 %v464, %v468
        %v529 = vsub.s32 %v464, %v469
        %v530 = vsub.s32 %v465, %v468
        %v531 = vsub.s32 %v465, %v469
        %v532 = vsub.s32 %v466, %v468
        %v533 = vsub.s32 %v466, %v469
        %s534 = smul.u32 %s29, 256
        %s535 = smul.u32 %s28, 256
        %s536 = ssub.s32 %s534, %s535
        %v537 = vstv %s536
        %vm538 = vcmp.eq.s32.totalorder %v470, %v537
        %vm539 = vcmp.eq.s32.totalorder %v471, %v537
        %vm540 = vcmp.eq.s32.totalorder %v472, %v537
        %vm541 = vcmp.eq.s32.totalorder %v473, %v537
        %vm542 = vcmp.eq.s32.totalorder %v474, %v537
        %vm543 = vcmp.eq.s32.totalorder %v475, %v537
        %vm544 = vcmp.eq.s32.totalorder %v476, %v537
        %vm545 = vcmp.eq.s32.totalorder %v477, %v537
        %vm546 = vcmp.eq.s32.totalorder %v478, %v537
        %vm547 = vcmp.eq.s32.totalorder %v479, %v537
        %vm548 = vcmp.eq.s32.totalorder %v480, %v537
        %vm549 = vcmp.eq.s32.totalorder %v481, %v537
        %vm550 = vcmp.eq.s32.totalorder %v482, %v537
        %vm551 = vcmp.eq.s32.totalorder %v483, %v537
        %vm552 = vcmp.eq.s32.totalorder %v484, %v537
        %vm553 = vcmp.eq.s32.totalorder %v485, %v537
        %vm554 = vcmp.eq.s32.totalorder %v486, %v537
        %vm555 = vcmp.eq.s32.totalorder %v487, %v537
        %vm556 = vcmp.eq.s32.totalorder %v488, %v537
        %vm557 = vcmp.eq.s32.totalorder %v489, %v537
        %vm558 = vcmp.eq.s32.totalorder %v490, %v537
        %vm559 = vcmp.eq.s32.totalorder %v491, %v537
        %vm560 = vcmp.eq.s32.totalorder %v492, %v537
        %vm561 = vcmp.eq.s32.totalorder %v493, %v537
        %vm562 = vcmp.eq.s32.totalorder %v494, %v537
        %vm563 = vcmp.eq.s32.totalorder %v495, %v537
        %vm564 = vcmp.eq.s32.totalorder %v496, %v537
        %vm565 = vcmp.eq.s32.totalorder %v497, %v537
        %vm566 = vcmp.eq.s32.totalorder %v498, %v537
        %vm567 = vcmp.eq.s32.totalorder %v499, %v537
        %vm568 = vcmp.eq.s32.totalorder %v500, %v537
        %vm569 = vcmp.eq.s32.totalorder %v501, %v537
        %vm570 = vcmp.eq.s32.totalorder %v502, %v537
        %vm571 = vcmp.eq.s32.totalorder %v503, %v537
        %vm572 = vcmp.eq.s32.totalorder %v504, %v537
        %vm573 = vcmp.eq.s32.totalorder %v505, %v537
        %vm574 = vcmp.eq.s32.totalorder %v506, %v537
        %vm575 = vcmp.eq.s32.totalorder %v507, %v537
        %vm576 = vcmp.eq.s32.totalorder %v508, %v537
        %vm577 = vcmp.eq.s32.totalorder %v509, %v537
        %vm578 = vcmp.eq.s32.totalorder %v510, %v537
        %vm579 = vcmp.eq.s32.totalorder %v511, %v537
        %vm580 = vcmp.eq.s32.totalorder %v512, %v537
        %vm581 = vcmp.eq.s32.totalorder %v513, %v537
        %vm582 = vcmp.eq.s32.totalorder %v514, %v537
        %vm583 = vcmp.eq.s32.totalorder %v515, %v537
        %vm584 = vcmp.eq.s32.totalorder %v516, %v537
        %vm585 = vcmp.eq.s32.totalorder %v517, %v537
        %vm586 = vcmp.eq.s32.totalorder %v518, %v537
        %vm587 = vcmp.eq.s32.totalorder %v519, %v537
        %vm588 = vcmp.eq.s32.totalorder %v520, %v537
        %vm589 = vcmp.eq.s32.totalorder %v521, %v537
        %vm590 = vcmp.eq.s32.totalorder %v522, %v537
        %vm591 = vcmp.eq.s32.totalorder %v523, %v537
        %vm592 = vcmp.eq.s32.totalorder %v524, %v537
        %vm593 = vcmp.eq.s32.totalorder %v525, %v537
        %vm594 = vcmp.eq.s32.totalorder %v526, %v537
        %vm595 = vcmp.eq.s32.totalorder %v527, %v537
        %vm596 = vcmp.eq.s32.totalorder %v528, %v537
        %vm597 = vcmp.eq.s32.totalorder %v529, %v537
        %vm598 = vcmp.eq.s32.totalorder %v530, %v537
        %vm599 = vcmp.eq.s32.totalorder %v531, %v537
        %vm600 = vcmp.eq.s32.totalorder %v532, %v537
        %vm601 = vcmp.eq.s32.totalorder %v533, %v537
        %v602 = vsel %vm538, 1.0, %v370
        %v603 = vsel %vm539, 1.0, %v371
        %v604 = vsel %vm540, 1.0, %v372
        %v605 = vsel %vm541, 1.0, %v373
        %v606 = vsel %vm542, 1.0, %v374
        %v607 = vsel %vm543, 1.0, %v375
        %v608 = vsel %vm544, 1.0, %v376
        %v609 = vsel %vm545, 1.0, %v377
        %v610 = vsel %vm546, 1.0, %v378
        %v611 = vsel %vm547, 1.0, %v379
        %v612 = vsel %vm548, 1.0, %v380
        %v613 = vsel %vm549, 1.0, %v381
        %v614 = vsel %vm550, 1.0, %v382
        %v615 = vsel %vm551, 1.0, %v383
        %v616 = vsel %vm552, 1.0, %v384
        %v617 = vsel %vm553, 1.0, %v385
        %v618 = vsel %vm554, 1.0, %v386
        %v619 = vsel %vm555, 1.0, %v387
        %v620 = vsel %vm556, 1.0, %v388
        %v621 = vsel %vm557, 1.0, %v389
        %v622 = vsel %vm558, 1.0, %v390
        %v623 = vsel %vm559, 1.0, %v391
        %v624 = vsel %vm560, 1.0, %v392
        %v625 = vsel %vm561, 1.0, %v393
        %v626 = vsel %vm562, 1.0, %v394
        %v627 = vsel %vm563, 1.0, %v395
        %v628 = vsel %vm564, 1.0, %v396
        %v629 = vsel %vm565, 1.0, %v397
        %v630 = vsel %vm566, 1.0, %v398
        %v631 = vsel %vm567, 1.0, %v399
        %v632 = vsel %vm568, 1.0, %v400
        %v633 = vsel %vm569, 1.0, %v401
        %v634 = vsel %vm570, 1.0, %v402
        %v635 = vsel %vm571, 1.0, %v403
        %v636 = vsel %vm572, 1.0, %v404
        %v637 = vsel %vm573, 1.0, %v405
        %v638 = vsel %vm574, 1.0, %v406
        %v639 = vsel %vm575, 1.0, %v407
        %v640 = vsel %vm576, 1.0, %v408
        %v641 = vsel %vm577, 1.0, %v409
        %v642 = vsel %vm578, 1.0, %v410
        %v643 = vsel %vm579, 1.0, %v411
        %v644 = vsel %vm580, 1.0, %v412
        %v645 = vsel %vm581, 1.0, %v413
        %v646 = vsel %vm582, 1.0, %v414
        %v647 = vsel %vm583, 1.0, %v415
        %v648 = vsel %vm584, 1.0, %v416
        %v649 = vsel %vm585, 1.0, %v417
        %v650 = vsel %vm586, 1.0, %v418
        %v651 = vsel %vm587, 1.0, %v419
        %v652 = vsel %vm588, 1.0, %v420
        %v653 = vsel %vm589, 1.0, %v421
        %v654 = vsel %vm590, 1.0, %v422
        %v655 = vsel %vm591, 1.0, %v423
        %v656 = vsel %vm592, 1.0, %v424
        %v657 = vsel %vm593, 1.0, %v425
        %v658 = vsel %vm594, 1.0, %v426
        %v659 = vsel %vm595, 1.0, %v427
        %v660 = vsel %vm596, 1.0, %v428
        %v661 = vsel %vm597, 1.0, %v429
        %v662 = vsel %vm598, 1.0, %v430
        %v663 = vsel %vm599, 1.0, %v431
        %v664 = vsel %vm600, 1.0, %v432
        %v665 = vsel %vm601, 1.0, %v433
        %v666 = vld [vmem:[%s201] sm:$0xff]
        %v667 = vld [vmem:[%s201 + $0x8] sm:$0xff]
        %668 = vmatpush.xpose.msra.mxu0 %v632
        %669 = vmatpush.xpose.msra.mxu0 %v630
        %670 = vmatpush.xpose.msra.mxu0 %v628
        %671 = vmatpush.xpose.msra.mxu0 %v626
        %672 = vmatpush.xpose.msra.mxu0 %v624
        %673 = vmatpush.xpose.msra.mxu0 %v622
        %674 = vmatpush.xpose.msra.mxu0 %v620
        %675 = vmatpush.xpose.msra.mxu0 %v618
        %676 = vmatpush.xpose.msra.mxu0 %v616
        %677 = vmatpush.xpose.msra.mxu0 %v614
        %678 = vmatpush.xpose.msra.mxu0 %v612
        %679 = vmatpush.xpose.msra.mxu0 %v610
        %680 = vmatpush.xpose.msra.mxu0 %v608
        %681 = vmatpush.xpose.msra.mxu0 %v606
        %682 = vmatpush.xpose.msra.mxu0 %v604
        %683 = vmatpush.xpose.msra.mxu0 %v602
        %684 = vmatmul.f32.gmra.mxu0 %v666
        %v685 = vpop.f32.mrf.mxu0
        %v686 = vadd.f32 0.0, %v685
        %687 = vdwg.mxu0
        %688 = vmatpush.xpose.msra.mxu0 %v633
        %689 = vmatpush.xpose.msra.mxu0 %v631
        %690 = vmatpush.xpose.msra.mxu0 %v629
        %691 = vmatpush.xpose.msra.mxu0 %v627
        %692 = vmatpush.xpose.msra.mxu0 %v625
        %693 = vmatpush.xpose.msra.mxu0 %v623
        %694 = vmatpush.xpose.msra.mxu0 %v621
        %695 = vmatpush.xpose.msra.mxu0 %v619
        %696 = vmatpush.xpose.msra.mxu0 %v617
        %697 = vmatpush.xpose.msra.mxu0 %v615
        %698 = vmatpush.xpose.msra.mxu0 %v613
        %699 = vmatpush.xpose.msra.mxu0 %v611
        %700 = vmatpush.xpose.msra.mxu0 %v609
        %701 = vmatpush.xpose.msra.mxu0 %v607
        %702 = vmatpush.xpose.msra.mxu0 %v605
        %703 = vmatpush.xpose.msra.mxu0 %v603
        %704 = vmatmul.f32.gmra.mxu0 %v667
        %v705 = vpop.f32.mrf.mxu0
        %v706 = vadd.f32 %v686, %v705
        %707 = vdwg.mxu0
        %708 = vmatpush.xpose.msra.mxu0 %v664
        %709 = vmatpush.xpose.msra.mxu0 %v662
        %710 = vmatpush.xpose.msra.mxu0 %v660
        %711 = vmatpush.xpose.msra.mxu0 %v658
        %712 = vmatpush.xpose.msra.mxu0 %v656
        %713 = vmatpush.xpose.msra.mxu0 %v654
        %714 = vmatpush.xpose.msra.mxu0 %v652
        %715 = vmatpush.xpose.msra.mxu0 %v650
        %716 = vmatpush.xpose.msra.mxu0 %v648
        %717 = vmatpush.xpose.msra.mxu0 %v646
        %718 = vmatpush.xpose.msra.mxu0 %v644
        %719 = vmatpush.xpose.msra.mxu0 %v642
        %720 = vmatpush.xpose.msra.mxu0 %v640
        %721 = vmatpush.xpose.msra.mxu0 %v638
        %722 = vmatpush.xpose.msra.mxu0 %v636
        %723 = vmatpush.xpose.msra.mxu0 %v634
        %724 = vmatmul.f32.gmra.mxu0 %v666
        %v725 = vpop.f32.mrf.mxu0
        %v726 = vadd.f32 0.0, %v725
        %727 = vdwg.mxu0
        %728 = vmatpush.xpose.msra.mxu0 %v665
        %729 = vmatpush.xpose.msra.mxu0 %v663
        %730 = vmatpush.xpose.msra.mxu0 %v661
        %731 = vmatpush.xpose.msra.mxu0 %v659
        %732 = vmatpush.xpose.msra.mxu0 %v657
        %733 = vmatpush.xpose.msra.mxu0 %v655
        %734 = vmatpush.xpose.msra.mxu0 %v653
        %735 = vmatpush.xpose.msra.mxu0 %v651
        %736 = vmatpush.xpose.msra.mxu0 %v649
        %737 = vmatpush.xpose.msra.mxu0 %v647
        %738 = vmatpush.xpose.msra.mxu0 %v645
        %739 = vmatpush.xpose.msra.mxu0 %v643
        %740 = vmatpush.xpose.msra.mxu0 %v641
        %741 = vmatpush.xpose.msra.mxu0 %v639
        %742 = vmatpush.xpose.msra.mxu0 %v637
        %743 = vmatpush.xpose.msra.mxu0 %v635
        %744 = vmatmul.f32.gmra.mxu0 %v667
        %v745 = vpop.f32.mrf.mxu0
        %v746 = vadd.f32 %v726, %v745
        %747 = vdwg.mxu0
        %748 = vst [vmem:[%s237] sm:$0xff] %v706
        %749 = vst [vmem:[%s237 + $0x8] sm:$0xff] %v746
        %s750 = sand.u32 %s109, 1
        %s751 = scalar_lea.sflag [#allocation4], %s750
        %s752 = sand.u32 %s109, 1
        %s753 = smul.addr %s752, 16
        %s754 = scalar_lea.vmem [#allocation7], %s753
        // Predicated region
        $region37: #{tpu_custom_call.1} parent=27 // pred_check
          %p755 = pneg %p119
        $region38: #{tpu_custom_call.1} parent=27 // pred_check_branch
          %757 = sbr.rel (%p755) target = $region40
        $region39: #{tpu_custom_call.1} parent=27 // pred_region
          %s758 = smul.u32 2, %s28
          %760 = vsyncadd %s751, 0
          %s761 = smul.addr %s27, 2
          %s762 = sadd.s32 %s758, %s761
          %s763 = smul.addr %s762, 8
          %s764 = scalar_lea.hbm %s2, %s763
          %s766 = sshll.u32 %s754, 4
          %s767 = int_to_ptr.vmem [resolvable:$true] %s766
          %s768 = sshll.u32 %s764, 4
          %s769 = int_to_ptr.hbm [resolvable:$true] %s768
          %771 = dma.vmem_to_hbm [thread:$0]  %s767, 256, %s769, %s751
        $region40: #{tpu_custom_call.1} parent=27 // pred_fallthru
          _
      $region28: #{tpu_custom_call.1} parent=5 // pred_fallthru
        _
      %p772 = scmp.le.s32.totalorder 2, %s17
      // Predicated region
      $region41: #{tpu_custom_call.1} parent=5 // pred_check
        %p773 = pneg %p772
      $region42: #{tpu_custom_call.1} parent=5 // pred_check_branch
        %775 = sbr.rel (%p773) target = $region44
      $region43: #{tpu_custom_call.1} parent=5 // pred_region
        %s776 = ssub.s32 %s17, 2
        // Predicated region
        $region45: #{tpu_custom_call.1} parent=43 // pred_check
          %p777 = pneg %p125
        $region46: #{tpu_custom_call.1} parent=43 // pred_check_branch
          %779 = sbr.rel (%p777) target = $region48
        $region47: #{tpu_custom_call.1} parent=43 // pred_region
          %s780 = sand.u32 %s110, 1
          %s781 = scalar_lea.sflag [#allocation4], %s780
          %s782 = sand.u32 %s110, 1
          %s783 = smul.addr %s782, 16
          %s784 = scalar_lea.vmem [#allocation7], %s783
          %786 = dma.done %s781, 256
        $region48: #{tpu_custom_call.1} parent=43 // pred_fallthru
          _
      $region44: #{tpu_custom_call.1} parent=5 // pred_fallthru
        _
    $region6: #{tpu_custom_call.1} parent=1 // loop_footer
      %s21 = sadd.s32 1, %s17
    $region7: #{tpu_custom_call.1} parent=1 // loop_footer_branch
      %16 = sbr.rel target = $region3
    $region8: #{tpu_custom_call.1} parent=1 // loop_exit
      _
    %787 = vsyncpa [#allocation3], 1
    %s788 = scalar_lea.sflag [#allocation3], 1
    %789 = vsyncpa %s788, 1
    %790 = vsyncpa [#allocation6], 1
    %s791 = scalar_lea.sflag [#allocation6], 1
    %792 = vsyncpa %s791, 1
    %793 = vsyncpa [#allocation4], 1
    %s794 = scalar_lea.sflag [#allocation4], 1
    %795 = vsyncpa %s794, 1

</llo_original>
